<compile_context>
chip_gen: v5e
topology: v5e:2x2
jax: 0.10.0
libtpu: 0.0.40
codegen_flags: <defaults>
</compile_context>

<pallas_src>
import math

import jax
import jax.numpy as jnp
from jax.experimental import pallas as pl
from jax.experimental.pallas import tpu as pltpu

_LANES = 128
_SUBLANES = 8


def _device_kind() -> str:
    try:
        return (jax.devices()[0].device_kind or "").lower()
    except Exception:
        return ""


def _num_tensorcores() -> int:
    # v7x exposes 2 TensorCores per chip; v5e/v6e have 1.
    kind = _device_kind()
    if "v7" in kind:
        return 2
    return 1


def _default_block_bytes() -> int:
    # 2 MiB on v5e (16 MiB default scoped VMEM), 4 MiB on v6e/v7x (32 MiB default).
    kind = _device_kind()
    if "v5" in kind:
        return 2 << 20
    return 4 << 20


def _round_up(x: int, m: int) -> int:
    return ((x + m - 1) // m) * m


def _make_act_kernel(name: str, compute_f32: bool):
    def kernel(x_ref, o_ref):
        x = x_ref[...]
        if compute_f32:
            x = x.astype(jnp.float32)
        if name == "swish":
            y = x * jax.nn.sigmoid(x)
        elif name == "relu":
            y = jnp.maximum(x, jnp.zeros((), x.dtype))
        elif name == "gelu":
            # PyTorch nn.GELU() default = exact (erf) formulation.
            inv_sqrt2 = jnp.asarray(1.0 / math.sqrt(2.0), dtype=x.dtype)
            y = 0.5 * x * (1.0 + jax.lax.erf(x * inv_sqrt2))
        else:
            raise ValueError(name)
        o_ref[...] = y.astype(o_ref.dtype)

    return kernel


def activation(x, name: str = "swish", target_block_bytes: int | None = None,
               donate_input: bool = False):
    """Elementwise activation matching torch `Activation(name)` forward."""
    if name not in ("swish", "relu", "gelu"):
        raise ValueError(name)

    orig_shape = x.shape
    dtype = x.dtype
    n = x.size
    if n == 0:
        return x

    itemsize = jnp.dtype(dtype).itemsize
    if target_block_bytes is None:
        target_block_bytes = _default_block_bytes()

    # Lane-dense 2D slab: (rows, 128). Zero-copy whenever n % 128 == 0; only
    # truly ragged sizes pay a tail pad + output slice.
    rows = pl.cdiv(n, _LANES)
    padded_n = rows * _LANES

    flat = x.reshape(-1)
    if padded_n != n:
        flat = jnp.pad(flat, (0, padded_n - n))
    x2d = flat.reshape(rows, _LANES)

    # Row tile: ~target_block_bytes per block, multiple of 8 sublanes.
    tr = target_block_bytes // (_LANES * itemsize)
    tr = max(_SUBLANES, (tr // _SUBLANES) * _SUBLANES)
    # Never allocate a block bigger than the (sublane-rounded) array.
    tr = min(tr, _round_up(rows, _SUBLANES))
    # Only on 2-TC parts (v7x): keep >= 2 grid steps so the "parallel" axis can
    # shard across both TensorCores. On single-TC v5e/v6e this would be pure
    # per-step overhead, so skip it there.
    if _num_tensorcores() >= 2 and rows > _SUBLANES and tr >= rows:
        tr = max(_SUBLANES, _round_up(pl.cdiv(rows, 2), _SUBLANES))

    grid = (pl.cdiv(rows, tr),)  # partial last block handled by Pallas masking

    # swish/gelu in f32 (accuracy, closer to PyTorch; hidden under DMA); relu native.
    compute_f32 = name != "relu"

    transcendentals = n if name in ("swish", "gelu") else 0
    cost = pl.CostEstimate(
        flops=2 * n,
        transcendentals=transcendentals,
        bytes_accessed=2 * n * itemsize,
    )

    out2d = pl.pallas_call(
        _make_act_kernel(name, compute_f32),
        out_shape=jax.ShapeDtypeStruct((rows, _LANES), dtype),
        grid_spec=pltpu.PrefetchScalarGridSpec(
            num_scalar_prefetch=0,
            grid=grid,
            in_specs=[pl.BlockSpec((tr, _LANES), lambda i: (i, 0))],
            out_specs=pl.BlockSpec((tr, _LANES), lambda i: (i, 0)),
        ),
        compiler_params=pltpu.CompilerParams(
            dimension_semantics=("parallel",),
        ),
        cost_estimate=cost,
        input_output_aliases=({0: 0} if donate_input else {}),
    )(x2d)

    if padded_n != n:
        return out2d.reshape(-1)[:n].reshape(orig_shape)
    return out2d.reshape(orig_shape)


if __name__ == "__main__":
    key = jax.random.PRNGKey(0)

    # Small NCHW input consistent with typical conv-net usage (n % 128 == 0 fast path).
    x = jax.random.normal(key, (2, 4, 16, 16), dtype=jnp.float32)
    y = jax.block_until_ready(activation(x, name="swish"))
    ref = x * jax.nn.sigmoid(x)
    assert y.shape == x.shape and y.dtype == x.dtype
    assert jnp.allclose(y, ref, atol=1e-5, rtol=1e-5)

    # n % 128 == 0 but NOT % 1024 -> previously padded, now zero-copy.
    x128 = jax.random.normal(jax.random.PRNGKey(2), (3, 128), dtype=jnp.float32)
    y128 = jax.block_until_ready(activation(x128, name="swish"))
    assert jnp.allclose(y128, x128 * jax.nn.sigmoid(x128), atol=1e-5, rtol=1e-5)

    # Truly ragged shape exercises the padded/tail path.
    x2 = jax.random.normal(jax.random.PRNGKey(1), (3, 5, 7), dtype=jnp.float32)
    y2 = jax.block_until_ready(activation(x2, name="swish"))
    assert jnp.allclose(y2, x2 * jax.nn.sigmoid(x2), atol=1e-5, rtol=1e-5)

    # Other activation branches.
    yr = jax.block_until_ready(activation(x, name="relu"))
    assert jnp.allclose(yr, jnp.maximum(x, 0.0), atol=1e-6, rtol=1e-6)
    yg = jax.block_until_ready(activation(x, name="gelu"))
    assert jnp.allclose(yg, jax.nn.gelu(x, approximate=False), atol=1e-5, rtol=1e-5)

    # bf16 swish (computed in f32 internally).
    xb = jax.random.normal(jax.random.PRNGKey(3), (2, 4, 16, 16), dtype=jnp.bfloat16)
    yb = jax.block_until_ready(activation(xb, name="swish"))
    refb = (xb.astype(jnp.float32) * jax.nn.sigmoid(xb.astype(jnp.float32))).astype(jnp.bfloat16)
    assert yb.dtype == jnp.bfloat16
    assert jnp.allclose(yb.astype(jnp.float32), refb.astype(jnp.float32), atol=1e-2, rtol=1e-2)

    print("KERNEL_OK")
</pallas_src>

<mosaic_0001>
module attributes {stable_mosaic.version = 11 : i64} {
  func.func @kernel(%arg0: i32, %arg1: memref<16x128xf32, #tpu.memory_space<vmem>>, %arg2: memref<16x128xf32, #tpu.memory_space<vmem>>) attributes {dimension_semantics = [#tpu.dimension_semantics<parallel>], iteration_bounds = array<i64: 1>, scalar_prefetch = 0 : i64, scratch_operands = 0 : i64, tpu.core_type = #tpu.core_type<tc>, window_params = [{transform_indices = @transform_0, window_bounds = array<i64: 16, 128>}, {transform_indices = @transform_1, window_bounds = array<i64: 16, 128>}]} {
    %c0 = arith.constant 0 : index
    %c0_0 = arith.constant 0 : index
    %0 = vector.load %arg1[%c0, %c0_0] : memref<16x128xf32, #tpu.memory_space<vmem>>, vector<16x128xf32>
    %1 = arith.negf %0 : vector<16x128xf32>
    %2 = math.exp %1 : vector<16x128xf32>
    %cst = arith.constant 1.000000e+00 : f32
    %3 = vector.broadcast %cst : f32 to vector<16x128xf32>
    %4 = arith.addf %3, %2 : vector<16x128xf32>
    %5 = arith.divf %3, %4 : vector<16x128xf32>
    %6 = arith.mulf %0, %5 : vector<16x128xf32>
    %c0_1 = arith.constant 0 : index
    %c0_2 = arith.constant 0 : index
    %7 = vector.load %arg2[%c0_1, %c0_2] : memref<16x128xf32, #tpu.memory_space<vmem>>, vector<16x128xf32>
    tpu.vector_store %arg2[%c0_1, %c0_2], %6 {strides = array<i32>} : memref<16x128xf32, #tpu.memory_space<vmem>>, vector<16x128xf32>,
    return
  }
  func.func @transform_0(%arg0: i32) -> (i32, i32) {
    %c0_i32 = arith.constant 0 : i32
    %c0_i32_0 = arith.constant 0 : i32
    return %arg0, %c0_i32 : i32, i32
  }
  func.func @transform_1(%arg0: i32) -> (i32, i32) {
    %c0_i32 = arith.constant 0 : i32
    %c0_i32_0 = arith.constant 0 : i32
    return %arg0, %c0_i32 : i32, i32
  }
}

</mosaic_0001>

<llo_original>
// kernel: tpu_custom_call.1
$region0: #{tpu_custom_call.1}
  #allocation0 [shape = 'u32[]', space=smem, size = 0x4, offset = 0x4, fixed_abs, tag = 'smem constant byte address 0x4 - core index']
  #allocation1 [shape = 'u32[72,128]{1,0:T(1,128)}', space=vmem, size = 0x9000, scoped, tag = 'internal scratch']
  %s0 = inlined_call_operand.hbm [shape: f32[16,128], index: 0, kind: input, shape index: {}]
  %s1 = inlined_call_operand.hbm [shape: f32[16,128], index: 1, kind: output, shape index: {}]
  %s2 = sld [smem:[#allocation0]]
  $region18: #{tpu_custom_call.1} parent=0
    _
  %s4 = ssub.s32 1, %s2
  %s5 = scalar_select 0, %s4, %s2
  $region1: #{tpu_custom_call.1} parent=0
    #allocation2 [shape = 'u8[8192]{0}', space=vmem, size = 0x2000, scoped, tag = 'input window, operand 0, single buffered']
    #allocation3 [shape = 's32[1]{0}', space=sflag, size = 0x4, scoped, tag = 'scoped memory for tpu_custom_call.1']
    #allocation4 [shape = 's32[1]{0}', space=sflag, size = 0x4, scoped, tag = 'scoped memory for tpu_custom_call.1']
    #allocation5 [shape = 'u8[8192]{0}', space=vmem, size = 0x2000, scoped, tag = 'output window, operand 0, single buffered']
    %6 = vsyncpa [#allocation3], 0
    %7 = vsyncpa [#allocation4], 0
    // Predicated region
    $region2: #{tpu_custom_call.1} parent=1 // pred_check
      _
    $region3: #{tpu_custom_call.1} parent=1 // pred_check_branch
      %9 = sbr.rel (0) target = $region5
    $region4: #{tpu_custom_call.1} parent=1 // pred_region
      %11 = vsyncadd [#allocation3], 0
      %s12 = sshll.u32 %s0, 4
      %s13 = int_to_ptr.hbm [resolvable:$true] %s12
      %s14 = sshll.u32 [#allocation2], 4
      %s15 = int_to_ptr.vmem [resolvable:$true] %s14
      %20 = dma.hbm_to_vmem [thread:$0]  %s13, 256, %s15, [#allocation3], 128, 128, 8
    $region5: #{tpu_custom_call.1} parent=1 // pred_fallthru
      _
    // Predicated region
    $region6: #{tpu_custom_call.1} parent=1 // pred_check
      _
    $region7: #{tpu_custom_call.1} parent=1 // pred_check_branch
      %22 = sbr.rel (0) target = $region9
    $region8: #{tpu_custom_call.1} parent=1 // pred_region
      %24 = dma.done [#allocation3], 256
    $region9: #{tpu_custom_call.1} parent=1 // pred_fallthru
      _
    %v25 = vld [vmem:[#allocation2] sm:$0xff]
    %v26 = vld [vmem:[#allocation2 + $0x8] sm:$0xff]
    %v27 = vxor.u32 %v25, 2147483648
    %v28 = vxor.u32 %v26, 2147483648
    %v29 = vmul.f32 %v27, 1.442695
    %v30 = vpow.pop %v29
    %v31 = vmul.f32 %v28, 1.442695
    %v32 = vpow.pop %v31
    %v33 = vadd.f32 %v30, 1.0
    %v34 = vadd.f32 %v32, 1.0
    %v35 = vrcp.pop %v33
    %v36 = vmul.f32 %v33, %v35
    %v37 = vsub.f32 1.0, %v36
    %v38 = vmul.f32 %v35, %v37
    %v39 = vadd.f32 %v35, %v38
    %vm40 = vweird.f32 %v33
    %vm41 = vweird.f32 %v35
    %vm42 = vmor %vm40, %vm41
    %v43 = vsel %vm42, %v35, %v39
    %v44 = vand.u32 2147483647, %v33
    %vm45 = vcmp.eq.f32.partialorder %v44, 8.507059e+37
    %v46 = vand.u32 %v33, 2147483648
    %v47 = vor.u32 1.1754944e-38, %v46
    %v48 = vsel %vm45, %v47, %v43
    %v49 = vmul.f32 1.0, %v48
    %v50 = vrcp.pop %v34
    %v51 = vmul.f32 %v34, %v50
    %v52 = vsub.f32 1.0, %v51
    %v53 = vmul.f32 %v50, %v52
    %v54 = vadd.f32 %v50, %v53
    %vm55 = vweird.f32 %v34
    %vm56 = vweird.f32 %v50
    %vm57 = vmor %vm55, %vm56
    %v58 = vsel %vm57, %v50, %v54
    %v59 = vand.u32 2147483647, %v34
    %vm60 = vcmp.eq.f32.partialorder %v59, 8.507059e+37
    %v61 = vand.u32 %v34, 2147483648
    %v62 = vor.u32 1.1754944e-38, %v61
    %v63 = vsel %vm60, %v62, %v58
    %v64 = vmul.f32 1.0, %v63
    %v65 = vmul.f32 %v25, %v49
    %v66 = vmul.f32 %v26, %v64
    %67 = vst [vmem:[#allocation5] sm:$0xff] %v65
    %68 = vst [vmem:[#allocation5 + $0x8] sm:$0xff] %v66
    // Predicated region
    $region10: #{tpu_custom_call.1} parent=1 // pred_check
      _
    $region11: #{tpu_custom_call.1} parent=1 // pred_check_branch
      %70 = sbr.rel (0) target = $region13
    $region12: #{tpu_custom_call.1} parent=1 // pred_region
      %72 = vsyncadd [#allocation4], 0
      %s73 = sshll.u32 [#allocation5], 4
      %s74 = int_to_ptr.vmem [resolvable:$true] %s73
      %s75 = sshll.u32 %s1, 4
      %s76 = int_to_ptr.hbm [resolvable:$true] %s75
      %81 = dma.vmem_to_hbm [thread:$0]  %s74, 256, %s76, [#allocation4], 128, 128, 8
    $region13: #{tpu_custom_call.1} parent=1 // pred_fallthru
      _
    // Predicated region
    $region14: #{tpu_custom_call.1} parent=1 // pred_check
      _
    $region15: #{tpu_custom_call.1} parent=1 // pred_check_branch
      %83 = sbr.rel (0) target = $region17
    $region16: #{tpu_custom_call.1} parent=1 // pred_region
      %85 = dma.done [#allocation4], 256
    $region17: #{tpu_custom_call.1} parent=1 // pred_fallthru
      _
    %86 = vsyncpa [#allocation3], 1
    %87 = vsyncpa [#allocation4], 1

</llo_original>
